<compile_context>
chip_gen: v7x
topology: tpu7x:2x2x1
jax: 0.10.0
libtpu: 0.0.40
codegen_flags: <defaults>
</compile_context>

<pallas_src>
import functools

import jax
import jax.numpy as jnp
from jax import lax
from jax.experimental import pallas as pl
from jax.experimental.pallas import tpu as pltpu


# ---------------------------------------------------------------------------
# Pallas kernel 1: fc_loc head  (Linear(180,20) -> ReLU -> Linear(20,6)), whole batch at once.
# ---------------------------------------------------------------------------
def _fc_loc_kernel(f_ref, w1_ref, b1_ref, w2_ref, b2_ref, theta_ref):
    # ~15 KFLOP total: full fp32 matmul precision here is noise next to the grid-sample kernel.
    h = jnp.dot(f_ref[...], w1_ref[...],
                preferred_element_type=jnp.float32,
                precision=lax.Precision.HIGHEST) + b1_ref[...]
    h = jnp.maximum(h, 0.0)
    theta_ref[...] = (jnp.dot(h, w2_ref[...],
                              preferred_element_type=jnp.float32,
                              precision=lax.Precision.HIGHEST)
                      + b2_ref[...]).astype(theta_ref.dtype)


def fc_loc(feats, w1, b1, w2, b2):
    """feats: (B, 180). w1: (180, 20), b1: (1, 20), w2: (20, 6), b2: (1, 6). Returns theta (B, 6)."""
    B = feats.shape[0]
    return pl.pallas_call(
        _fc_loc_kernel,
        out_shape=jax.ShapeDtypeStruct((B, 6), jnp.float32),
    )(feats, w1, b1, w2, b2)


# ---------------------------------------------------------------------------
# Pallas kernel 2: fused affine_grid + grid_sample (bilinear, zeros padding, align_corners=False).
# ---------------------------------------------------------------------------
def _split_bf16(v):
    """Split an f32 array into bf16 hi/lo parts (v ~= hi + lo up to ~2^-17 relative)."""
    hi = v.astype(jnp.bfloat16)
    lo = (v - hi.astype(jnp.float32)).astype(jnp.bfloat16)
    return hi, lo


def _grid_sample_kernel(theta_ref, x_ref, o_ref, acc_ref, *,
                        h_in, w_in, h_out, w_out, tile, k_chunk):
    b = pl.program_id(0)
    t = pl.program_id(1)
    hw_in = h_in * w_in

    # --- affine grid for this tile of output pixels (align_corners=False convention) ---
    p = t * tile + lax.broadcasted_iota(jnp.int32, (1, tile), 1)      # flat output pixel index
    if (w_out & (w_out - 1)) == 0:                                    # integer row/col split
        h_oi = p >> (w_out.bit_length() - 1)
        w_oi = p & (w_out - 1)
    else:
        h_oi = p // w_out
        w_oi = p - h_oi * w_out
    x_t = (2.0 * w_oi.astype(jnp.float32) + 1.0) * (1.0 / w_out) - 1.0   # target coords in [-1, 1]
    y_t = (2.0 * h_oi.astype(jnp.float32) + 1.0) * (1.0 / h_out) - 1.0

    t00 = theta_ref[b, 0]; t01 = theta_ref[b, 1]; t02 = theta_ref[b, 2]
    t10 = theta_ref[b, 3]; t11 = theta_ref[b, 4]; t12 = theta_ref[b, 5]
    x_s = t00 * x_t + t01 * y_t + t02                                 # normalized source coords
    y_s = t10 * x_t + t11 * y_t + t12

    # un-normalize (align_corners=False): fractional source pixel coordinates, shape (1, tile)
    ix = ((x_s + 1.0) * w_in - 1.0) * 0.5
    iy = ((y_s + 1.0) * h_in - 1.0) * 0.5

    w_pow2 = (w_in & (w_in - 1)) == 0
    w_shift = w_in.bit_length() - 1
    n_k = hw_in // k_chunk

    acc_ref[...] = jnp.zeros_like(acc_ref)

    def body(k, carry):
        base = pl.multiple_of(k * k_chunk, k_chunk)
        # Flat input pixel index for this chunk of rows of M, built directly in its final
        # (k_chunk, tile) layout -- no 3-D outer product, no reshape.
        row = base + lax.broadcasted_iota(jnp.int32, (k_chunk, tile), 0)
        if w_pow2:
            ry_i = row >> w_shift
            rx_i = row & (w_in - 1)
        else:
            ry_i = row // w_in
            rx_i = row - ry_i * w_in
        # Bilinear "tent" weights: max(0, 1-|r - coord|) is exactly the bilinear weight at integer r,
        # and input rows outside the image never appear here -> PyTorch zeros padding exactly.
        wy = jnp.maximum(1.0 - jnp.abs(ry_i.astype(jnp.float32) - iy), 0.0)
        wx = jnp.maximum(1.0 - jnp.abs(rx_i.astype(jnp.float32) - ix), 0.0)
        m = wy * wx                                                   # (k_chunk, tile) f32

        # Manual bf16_3x (Precision.HIGH equivalent): 3 native bf16 MXU passes, fp32 accumulate.
        m_hi, m_lo = _split_bf16(m)
        xc_hi, xc_lo = _split_bf16(x_ref[:, pl.ds(base, k_chunk)])    # (C, k_chunk)
        part = (jnp.dot(xc_hi, m_hi, preferred_element_type=jnp.float32)
                + jnp.dot(xc_hi, m_lo, preferred_element_type=jnp.float32)
                + jnp.dot(xc_lo, m_hi, preferred_element_type=jnp.float32))
        acc_ref[...] += part
        return carry

    lax.fori_loop(0, n_k, body, 0)
    o_ref[...] = acc_ref[...].astype(o_ref.dtype)


def affine_grid_sample(x_nchw, theta, out_hw, *, tile=512, k_chunk=512):
    """x_nchw: (B, C, H_in, W_in) f32, theta: (B, 6) f32. Returns (B, C, H_out, W_out)."""
    B, C, H_in, W_in = x_nchw.shape
    H_out, W_out = out_hw
    HW_in, HW_out = H_in * W_in, H_out * W_out
    assert HW_out % tile == 0, "output tile must divide H_out*W_out"
    assert HW_in % k_chunk == 0, "k_chunk must divide H_in*W_in"

    x2 = x_nchw.reshape(B, C, HW_in)      # free reshape of NCHW -- no transpose passes over HBM

    kernel = functools.partial(_grid_sample_kernel, h_in=H_in, w_in=W_in,
                               h_out=H_out, w_out=W_out, tile=tile, k_chunk=k_chunk)
    out = pl.pallas_call(
        kernel,
        out_shape=jax.ShapeDtypeStruct((B, C, HW_out), x_nchw.dtype),
        grid_spec=pltpu.PrefetchScalarGridSpec(
            num_scalar_prefetch=0,
            grid=(B, HW_out // tile),
            in_specs=[
                # theta: tiny scalar table, whole array in SMEM.
                pl.BlockSpec(memory_space=pltpu.MemorySpace.SMEM),
                # x: full (C, HW_in) image resident per batch element (1 MiB), constant across t.
                pl.BlockSpec((pl.Squeezed(), C, HW_in), lambda b, t: (b, 0, 0)),
            ],
            out_specs=pl.BlockSpec((pl.Squeezed(), C, tile), lambda b, t: (b, 0, t)),
            scratch_shapes=[pltpu.VMEM((C, tile), jnp.float32)],   # fp32 accumulator
        ),
        compiler_params=pltpu.CompilerParams(
            # batch axis parallel (v7x megacore split lands on b); tile axis sequential per core so
            # the per-batch x block stays resident across all output tiles.
            dimension_semantics=("parallel", "arbitrary"),
            vmem_limit_bytes=48 * 1024 * 1024,
        ),
        cost_estimate=pl.CostEstimate(
            flops=2 * B * C * HW_in * HW_out,
            transcendentals=0,
            bytes_accessed=4 * B * C * (HW_in + HW_out),
        ),
    )(theta, x2)
    return out.reshape(B, C, H_out, W_out)


# ---------------------------------------------------------------------------
# Localization backbone (MaxPool2d(2,2) + valid Conv2d + ReLU, x3) -- plain XLA ops.
# TODO(synk): port this conv/pool backbone to Pallas (im2col + MXU matmul); it is tiny vs grid_sample.
# ---------------------------------------------------------------------------
def _maxpool2x2(x):
    B, C, H, W = x.shape
    return x.reshape(B, C, H // 2, 2, W // 2, 2).max(axis=(3, 5))


def _conv_valid(x, w):  # x NCHW, w OIHW
    return lax.conv_general_dilated(x, w, window_strides=(1, 1), padding="VALID",
                                    dimension_numbers=("NCHW", "OIHW", "NCHW"))


def localization_features(x, cw1, cw2, cw3):
    h = jnp.maximum(_conv_valid(_maxpool2x2(x), cw1), 0.0)   # (B, 128, 28, 28)
    h = jnp.maximum(_conv_valid(_maxpool2x2(h), cw2), 0.0)   # (B, 20, 10, 10)
    h = jnp.maximum(_conv_valid(_maxpool2x2(h), cw3), 0.0)   # (B, 20, 3, 3)
    return h.reshape(h.shape[0], -1)                         # (B, 180)


def spatial_transformer2_forward(x, params, spatial_dims=(64, 64)):
    feats = localization_features(x, params["cw1"], params["cw2"], params["cw3"])
    theta = fc_loc(feats, params["fc1_w"], params["fc1_b"], params["fc2_w"], params["fc2_b"])
    return affine_grid_sample(x, theta, spatial_dims)


# ---------------------------------------------------------------------------
# Pure-JAX references (PyTorch semantics: align_corners=False, bilinear, zeros padding).
# ---------------------------------------------------------------------------
def fc_loc_ref(feats, w1, b1, w2, b2):
    h = jnp.maximum(jnp.dot(feats, w1, precision=lax.Precision.HIGHEST) + b1, 0.0)
    return jnp.dot(h, w2, precision=lax.Precision.HIGHEST) + b2


def affine_grid_sample_ref(x, theta, out_hw):
    B, C, H_in, W_in = x.shape
    H_out, W_out = out_hw
    xs = (2.0 * (jnp.arange(W_out, dtype=jnp.float32) + 0.5)) / W_out - 1.0
    ys = (2.0 * (jnp.arange(H_out, dtype=jnp.float32) + 0.5)) / H_out - 1.0
    y_t, x_t = jnp.meshgrid(ys, xs, indexing="ij")                   # (H_out, W_out)
    th = theta[:, :, None, None]                                     # (B, 6, 1, 1)
    x_s = th[:, 0] * x_t + th[:, 1] * y_t + th[:, 2]                 # (B, H_out, W_out)
    y_s = th[:, 3] * x_t + th[:, 4] * y_t + th[:, 5]
    ix = ((x_s + 1.0) * W_in - 1.0) * 0.5
    iy = ((y_s + 1.0) * H_in - 1.0) * 0.5
    ix0 = jnp.floor(ix); iy0 = jnp.floor(iy)
    fx = ix - ix0;       fy = iy - iy0
    ix0 = ix0.astype(jnp.int32); iy0 = iy0.astype(jnp.int32)

    def corner(iy_c, ix_c, w):
        valid = (iy_c >= 0) & (iy_c < H_in) & (ix_c >= 0) & (ix_c < W_in)
        iy_cl = jnp.clip(iy_c, 0, H_in - 1)
        ix_cl = jnp.clip(ix_c, 0, W_in - 1)
        v = jax.vmap(lambda xb, iyb, ixb: xb[:, iyb, ixb])(x, iy_cl, ix_cl)  # (B, C, H_out, W_out)
        return v * (w * valid.astype(x.dtype))[:, None, :, :]

    return (corner(iy0,     ix0,     (1.0 - fy) * (1.0 - fx)) +
            corner(iy0,     ix0 + 1, (1.0 - fy) * fx) +
            corner(iy0 + 1, ix0,     fy * (1.0 - fx)) +
            corner(iy0 + 1, ix0 + 1, fy * fx))


if __name__ == "__main__":
    # Shapes implied by the module: in_channels=64, spatial_dims=(64, 64).  The hard-coded
    # localization CNN only flattens to 20*3*3=180 for 64x64 inputs, so the input must be (B,64,64,64).
    B, C, H, W = 2, 64, 64, 64

    key = jax.random.PRNGKey(0)
    ks = jax.random.split(key, 8)
    x = jax.random.normal(ks[0], (B, C, H, W), dtype=jnp.float32)

    # Synthetic parameters standing in for trained weights (conv OIHW, linears stored as (in, out)).
    # NOTE: the module's zero-init of fc_loc[2] would make theta exactly the identity (trivial copy),
    # so we perturb around the identity to exercise the bilinear sampler and zero padding.
    params = dict(
        cw1=jax.random.normal(ks[1], (128, 64, 5, 5), jnp.float32) * (1.0 / (64 * 25) ** 0.5),
        cw2=jax.random.normal(ks[2], (20, 128, 5, 5), jnp.float32) * (1.0 / (128 * 25) ** 0.5),
        cw3=jax.random.normal(ks[3], (20, 20, 3, 3), jnp.float32) * (1.0 / (20 * 9) ** 0.5),
        fc1_w=jax.random.normal(ks[4], (180, 20), jnp.float32) * (1.0 / 180.0 ** 0.5),
        fc1_b=jax.random.normal(ks[5], (1, 20), jnp.float32) * 0.01,
        fc2_w=jax.random.normal(ks[6], (20, 6), jnp.float32) * 0.01,
        fc2_b=(jnp.array([[1.0, 0.0, 0.0, 0.0, 1.0, 0.0]], jnp.float32)
               + 0.1 * jax.random.normal(ks[7], (1, 6), jnp.float32)),
    )

    rois = jax.block_until_ready(spatial_transformer2_forward(x, params, spatial_dims=(H, W)))
    assert rois.shape == (B, C, H, W) and rois.dtype == x.dtype

    # --- correctness vs pure-JAX references ---
    feats = localization_features(x, params["cw1"], params["cw2"], params["cw3"])
    theta = fc_loc(feats, params["fc1_w"], params["fc1_b"], params["fc2_w"], params["fc2_b"])
    theta_ref = fc_loc_ref(feats, params["fc1_w"], params["fc1_b"], params["fc2_w"], params["fc2_b"])
    assert jnp.allclose(theta, theta_ref, atol=1e-3, rtol=1e-3), "fc_loc kernel mismatch"

    rois_ref = affine_grid_sample_ref(x, theta, (H, W))
    assert jnp.allclose(rois, rois_ref, atol=1e-3, rtol=1e-3), "grid_sample kernel mismatch"

    print("KERNEL_OK")
</pallas_src>

<mosaic_0001>
module attributes {stable_mosaic.version = 11 : i64} {
  func.func @_fc_loc_kernel(%arg0: memref<2x180xf32, #tpu.memory_space<vmem>>, %arg1: memref<180x20xf32, #tpu.memory_space<vmem>>, %arg2: memref<1x20xf32, #tpu.memory_space<vmem>>, %arg3: memref<20x6xf32, #tpu.memory_space<vmem>>, %arg4: memref<1x6xf32, #tpu.memory_space<vmem>>, %arg5: memref<2x6xf32, #tpu.memory_space<vmem>>) attributes {dimension_semantics = [], scalar_prefetch = 0 : i64, scratch_operands = 0 : i64, tpu.core_type = #tpu.core_type<tc>} {
    %c0 = arith.constant 0 : index
    %c0_0 = arith.constant 0 : index
    %0 = vector.load %arg0[%c0, %c0_0] : memref<2x180xf32, #tpu.memory_space<vmem>>, vector<2x180xf32>
    %c0_1 = arith.constant 0 : index
    %c0_2 = arith.constant 0 : index
    %1 = vector.load %arg1[%c0_1, %c0_2] : memref<180x20xf32, #tpu.memory_space<vmem>>, vector<180x20xf32>
    %cst = arith.constant dense<0.000000e+00> : vector<2x20xf32>
    %2 = tpu.matmul %0, %1, %cst {dimension_numbers = #tpu.dot_dimension_numbers<[1], [0], [0], [1], [0, 0, 1, 1], [], []>, precision = #tpu.contract_precision<fp32>} : vector<2x180xf32>, vector<180x20xf32>, vector<2x20xf32> -> vector<2x20xf32>
    %c0_3 = arith.constant 0 : index
    %c0_4 = arith.constant 0 : index
    %3 = vector.load %arg2[%c0_3, %c0_4] : memref<1x20xf32, #tpu.memory_space<vmem>>, vector<1x20xf32>
    %4 = vector.broadcast %3 : vector<1x20xf32> to vector<2x20xf32>
    %5 = arith.addf %2, %4 : vector<2x20xf32>
    %cst_5 = arith.constant 0.000000e+00 : f32
    %6 = vector.broadcast %cst_5 : f32 to vector<2x20xf32>
    %7 = arith.maximumf %5, %6 : vector<2x20xf32>
    %c0_6 = arith.constant 0 : index
    %c0_7 = arith.constant 0 : index
    %8 = vector.load %arg3[%c0_6, %c0_7] : memref<20x6xf32, #tpu.memory_space<vmem>>, vector<20x6xf32>
    %cst_8 = arith.constant dense<0.000000e+00> : vector<2x6xf32>
    %9 = tpu.matmul %7, %8, %cst_8 {dimension_numbers = #tpu.dot_dimension_numbers<[1], [0], [0], [1], [0, 0, 1, 1], [], []>, precision = #tpu.contract_precision<fp32>} : vector<2x20xf32>, vector<20x6xf32>, vector<2x6xf32> -> vector<2x6xf32>
    %c0_9 = arith.constant 0 : index
    %c0_10 = arith.constant 0 : index
    %10 = vector.load %arg4[%c0_9, %c0_10] : memref<1x6xf32, #tpu.memory_space<vmem>>, vector<1x6xf32>
    %11 = vector.broadcast %10 : vector<1x6xf32> to vector<2x6xf32>
    %12 = arith.addf %9, %11 : vector<2x6xf32>
    %c0_11 = arith.constant 0 : index
    %c0_12 = arith.constant 0 : index
    %13 = vector.load %arg5[%c0_11, %c0_12] : memref<2x6xf32, #tpu.memory_space<vmem>>, vector<2x6xf32>
    tpu.vector_store %arg5[%c0_11, %c0_12], %12 {strides = array<i32>} : memref<2x6xf32, #tpu.memory_space<vmem>>, vector<2x6xf32>,
    return
  }
}

</mosaic_0001>

<llo_original>
// kernel: tpu_custom_call.1
$region0: #{tpu_custom_call.1}
  #allocation0 [shape = 'u32[]', space=smem, size = 0x4, offset = 0x4, fixed_abs, tag = 'smem constant byte address 0x4 - core index']
  #allocation1 [shape = 'u32[144,128]{1,0:T(1,128)}', space=vmem, size = 0x12000, scoped, tag = 'internal scratch']
  %s0 = inlined_call_operand.vmem [shape: f32[2,180], index: 0, kind: input, shape index: {}]
  %s1 = inlined_call_operand.vmem [shape: f32[180,20], index: 1, kind: input, shape index: {}]
  %s2 = inlined_call_operand.vmem [shape: f32[1,20], index: 2, kind: input, shape index: {}]
  %s3 = inlined_call_operand.vmem [shape: f32[20,6], index: 3, kind: input, shape index: {}]
  %s4 = inlined_call_operand.vmem [shape: f32[1,6], index: 4, kind: input, shape index: {}]
  %s5 = inlined_call_operand.hbm [shape: f32[2,6], index: 5, kind: output, shape index: {}]
  %s6 = sld [smem:[#allocation0]]
  $region30: #{tpu_custom_call.1} parent=0
    _
  %s8 = ssub.s32 1, %s6
  %s9 = scalar_select 0, %s8, %s6
  $region1: #{tpu_custom_call.1} parent=0
    #allocation2 [shape = 'u8[1024]{0}', space=vmem, size = 0x400, scoped, tag = 'output window, operand 0, single buffered']
    #allocation3 [shape = 's32[1]{0}', space=sflag, size = 0x4, scoped, tag = 'scoped memory for tpu_custom_call.1']
    %10 = vsyncpa [#allocation3], 0
    // Predicated region
    $region2: #{tpu_custom_call.1} parent=1 // pred_check
      _
    $region3: #{tpu_custom_call.1} parent=1 // pred_check_branch
      %12 = sbr.rel (0) target = $region5
    $region4: #{tpu_custom_call.1} parent=1 // pred_region
      _
    $region5: #{tpu_custom_call.1} parent=1 // pred_fallthru
      _
    // Predicated region
    $region6: #{tpu_custom_call.1} parent=1 // pred_check
      _
    $region7: #{tpu_custom_call.1} parent=1 // pred_check_branch
      %14 = sbr.rel (0) target = $region9
    $region8: #{tpu_custom_call.1} parent=1 // pred_region
      _
    $region9: #{tpu_custom_call.1} parent=1 // pred_fallthru
      _
    // Predicated region
    $region10: #{tpu_custom_call.1} parent=1 // pred_check
      _
    $region11: #{tpu_custom_call.1} parent=1 // pred_check_branch
      %16 = sbr.rel (0) target = $region13
    $region12: #{tpu_custom_call.1} parent=1 // pred_region
      _
    $region13: #{tpu_custom_call.1} parent=1 // pred_fallthru
      _
    // Predicated region
    $region14: #{tpu_custom_call.1} parent=1 // pred_check
      _
    $region15: #{tpu_custom_call.1} parent=1 // pred_check_branch
      %18 = sbr.rel (0) target = $region17
    $region16: #{tpu_custom_call.1} parent=1 // pred_region
      _
    $region17: #{tpu_custom_call.1} parent=1 // pred_fallthru
      _
    // Predicated region
    $region18: #{tpu_custom_call.1} parent=1 // pred_check
      _
    $region19: #{tpu_custom_call.1} parent=1 // pred_check_branch
      %20 = sbr.rel (0) target = $region21
    $region20: #{tpu_custom_call.1} parent=1 // pred_region
      _
    $region21: #{tpu_custom_call.1} parent=1 // pred_fallthru
      _
    %v21 = vld [vmem:[%s0] sm:$0xf]
    %v22 = vld [vmem:[%s1] sm:$0xff]
    %v23 = vld [vmem:[%s1 + $0x8] sm:$0xff]
    %v24 = vld [vmem:[%s1 + $0x10] sm:$0xff]
    %v25 = vld [vmem:[%s1 + $0x18] sm:$0xff]
    %v26 = vld [vmem:[%s1 + $0x20] sm:$0xff]
    %v27 = vld [vmem:[%s1 + $0x28] sm:$0xff]
    %v28 = vld [vmem:[%s1 + $0x30] sm:$0xff]
    %v29 = vld [vmem:[%s1 + $0x38] sm:$0xff]
    %v30 = vld [vmem:[%s1 + $0x40] sm:$0xff]
    %v31 = vld [vmem:[%s1 + $0x48] sm:$0xff]
    %v32 = vld [vmem:[%s1 + $0x50] sm:$0xff]
    %v33 = vld [vmem:[%s1 + $0x58] sm:$0xff]
    %v34 = vld [vmem:[%s1 + $0x60] sm:$0xff]
    %v35 = vld [vmem:[%s1 + $0x68] sm:$0xff]
    %v36 = vld [vmem:[%s1 + $0x70] sm:$0xff]
    %v37 = vld [vmem:[%s1 + $0x78] sm:$0xff]
    %v38 = vld [vmem:[%s1 + $0x80] sm:$0xff]
    %v39 = vld [vmem:[%s1 + $0x88] sm:$0xff]
    %v40 = vld [vmem:[%s1 + $0x90] sm:$0xff]
    %v41 = vld [vmem:[%s1 + $0x98] sm:$0xff]
    %v42 = vld [vmem:[%s1 + $0xa0] sm:$0xff]
    %v43 = vld [vmem:[%s1 + $0xa8] sm:$0xff]
    %v44 = vld [vmem:[%s1 + $0xb0] sm:$0xf]
    %v45 = vld [vmem:[%s2] sm:$0x1]
    %v47 = vlaneseq
    %v48 = vshrl.u32 %v47, 7
    %v49 = vsub.s32 0, %v48
    %v50 = vrot.slane %v45, %v49
    %v54 = vunpack.c.l.s4 1983009808
    %v55 = vunpack.c.0.s8 %v54
    %v56 = vlaneseq
    %v57 = vshrl.u32 %v56, 7
    %v58 = vsub.s32 %v55, %v57
    %v59 = vrot.slane %v21, %v58
    %v60 = vcombine.high %v59, %v59
    %vm62 = vcmask 424960
    %v63 = vsel %vm62, %v60, 0
    %vm65 = vcmask 1043456
    %v67 = vsel %vm65, %v44, 0
    %69 = vmatprep.subr.mxu0 0.0
    %v70 = vand.u32 %v22, 4294901760
    %71 = vmatpush1.msra.mxu0 %v70
    %72 = vmatprep.subr.mxu0 0.0
    %v73 = vand.u32 %v23, 4294901760
    %74 = vmatpush1.msra.mxu0 %v73
    %75 = vmatprep.subr.mxu0 0.0
    %v76 = vand.u32 %v24, 4294901760
    %77 = vmatpush1.msra.mxu0 %v76
    %78 = vmatprep.subr.mxu0 0.0
    %v79 = vand.u32 %v25, 4294901760
    %80 = vmatpush1.msra.mxu0 %v79
    %81 = vmatprep.subr.mxu0 0.0
    %v82 = vand.u32 %v26, 4294901760
    %83 = vmatpush1.msra.mxu0 %v82
    %84 = vmatprep.subr.mxu0 0.0
    %v85 = vand.u32 %v27, 4294901760
    %86 = vmatpush1.msra.mxu0 %v85
    %87 = vmatprep.subr.mxu0 0.0
    %v88 = vand.u32 %v28, 4294901760
    %89 = vmatpush1.msra.mxu0 %v88
    %90 = vmatprep.subr.mxu0 0.0
    %v91 = vand.u32 %v29, 4294901760
    %92 = vmatpush1.msra.mxu0 %v91
    %93 = vmatprep.subr.mxu0 0.0
    %v94 = vand.u32 %v30, 4294901760
    %95 = vmatpush1.msra.mxu0 %v94
    %96 = vmatprep.subr.mxu0 0.0
    %v97 = vand.u32 %v31, 4294901760
    %98 = vmatpush1.msra.mxu0 %v97
    %99 = vmatprep.subr.mxu0 0.0
    %v100 = vand.u32 %v32, 4294901760
    %101 = vmatpush1.msra.mxu0 %v100
    %102 = vmatprep.subr.mxu0 0.0
    %v103 = vand.u32 %v33, 4294901760
    %104 = vmatpush1.msra.mxu0 %v103
    %105 = vmatprep.subr.mxu0 0.0
    %v106 = vand.u32 %v34, 4294901760
    %107 = vmatpush1.msra.mxu0 %v106
    %108 = vmatprep.subr.mxu0 0.0
    %v109 = vand.u32 %v35, 4294901760
    %110 = vmatpush1.msra.mxu0 %v109
    %111 = vmatprep.subr.mxu0 0.0
    %v112 = vand.u32 %v36, 4294901760
    %113 = vmatpush1.msra.mxu0 %v112
    %114 = vmatprep.subr.mxu0 0.0
    %v115 = vand.u32 %v37, 4294901760
    %116 = vmatpush1.msra.mxu0 %v115
    %117 = vmatprep.subr.mxu0 0.0
    %v118 = vand.u32 %v38, 4294901760
    %119 = vmatpush1.msra.mxu0 %v118
    %120 = vmatprep.subr.mxu0 0.0
    %v121 = vand.u32 %v39, 4294901760
    %122 = vmatpush1.msra.mxu0 %v121
    %123 = vmatprep.subr.mxu0 0.0
    %v124 = vand.u32 %v40, 4294901760
    %125 = vmatpush1.msra.mxu0 %v124
    %126 = vmatprep.subr.mxu0 0.0
    %v127 = vand.u32 %v41, 4294901760
    %128 = vmatpush1.msra.mxu0 %v127
    %129 = vmatprep.subr.mxu0 0.0
    %v130 = vand.u32 %v42, 4294901760
    %131 = vmatpush1.msra.mxu0 %v130
    %132 = vmatprep.subr.mxu0 0.0
    %v133 = vand.u32 %v43, 4294901760
    %134 = vmatpush1.msra.mxu0 %v133
    %135 = vmatprep.subr.mxu0 0.0
    %v136 = vand.u32 %v67, 4294901760
    %137 = vmatpush1.msra.mxu0 %v136
    %138 = vmatprep.subr.mxu0 0.0
    %139 = vmatpush1.msra.mxu0 0.0
    %140 = vmatprep.subr.mxu0 0.0
    %141 = vmatpush1.msra.mxu0 0.0
    %142 = vmatprep.subr.mxu0 0.0
    %143 = vmatpush1.msra.mxu0 0.0
    %144 = vmatprep.subr.mxu0 0.0
    %145 = vmatpush1.msra.mxu0 0.0
    %146 = vmatprep.subr.mxu0 0.0
    %147 = vmatpush1.msra.mxu0 0.0
    %148 = vmatprep.subr.mxu0 0.0
    %149 = vmatpush1.msra.mxu0 0.0
    %150 = vmatprep.subr.mxu0 0.0
    %151 = vmatpush1.msra.mxu0 0.0
    %152 = vmatprep.subr.mxu0 0.0
    %153 = vmatpush1.msra.mxu0 0.0
    %154 = vmatprep.subr.mxu0 0.0
    %155 = vmatpush1.msra.mxu0 0.0
    %v156 = vand.u32 %v63, 4294901760
    %v157 = vsub.f32 %v63, %v156
    %v158 = vand.u32 %v157, 4294901760
    %v159 = vsub.f32 %v157, %v158
    %v160 = vand.u32 %v159, 4294901760
    %161 = vmatprep.mubr.f32.mxu0 %v160
    %v162 = vand.u32 %v59, 4294901760
    %v163 = vsub.f32 %v59, %v162
    %v164 = vand.u32 %v163, 4294901760
    %v165 = vsub.f32 %v163, %v164
    %v166 = vand.u32 %v165, 4294901760
    %167 = vmatmul.mubr.f32.gmra.mrb[0].mxu0 %v166
    %v168 = vpop.f32.mrb[0].mxu0
    %v169 = vadd.f32 %v50, %v168
    %v170 = vpop.f32.mrb[0].mxu0
    %171 = vdwg.mxu0
    %172 = vmatprep.subr.mxu0 0.0
    %v173 = vand.u32 %v22, 4294901760
    %v174 = vsub.f32 %v22, %v173
    %v175 = vand.u32 %v174, 4294901760
    %v176 = vsub.f32 %v174, %v175
    %v177 = vand.u32 %v176, 4294901760
    %178 = vmatpush1.msra.mxu0 %v177
    %179 = vmatprep.subr.mxu0 0.0
    %v180 = vand.u32 %v23, 4294901760
    %v181 = vsub.f32 %v23, %v180
    %v182 = vand.u32 %v181, 4294901760
    %v183 = vsub.f32 %v181, %v182
    %v184 = vand.u32 %v183, 4294901760
    %185 = vmatpush1.msra.mxu0 %v184
    %186 = vmatprep.subr.mxu0 0.0
    %v187 = vand.u32 %v24, 4294901760
    %v188 = vsub.f32 %v24, %v187
    %v189 = vand.u32 %v188, 4294901760
    %v190 = vsub.f32 %v188, %v189
    %v191 = vand.u32 %v190, 4294901760
    %192 = vmatpush1.msra.mxu0 %v191
    %193 = vmatprep.subr.mxu0 0.0
    %v194 = vand.u32 %v25, 4294901760
    %v195 = vsub.f32 %v25, %v194
    %v196 = vand.u32 %v195, 4294901760
    %v197 = vsub.f32 %v195, %v196
    %v198 = vand.u32 %v197, 4294901760
    %199 = vmatpush1.msra.mxu0 %v198
    %200 = vmatprep.subr.mxu0 0.0
    %v201 = vand.u32 %v26, 4294901760
    %v202 = vsub.f32 %v26, %v201
    %v203 = vand.u32 %v202, 4294901760
    %v204 = vsub.f32 %v202, %v203
    %v205 = vand.u32 %v204, 4294901760
    %206 = vmatpush1.msra.mxu0 %v205
    %207 = vmatprep.subr.mxu0 0.0
    %v208 = vand.u32 %v27, 4294901760
    %v209 = vsub.f32 %v27, %v208
    %v210 = vand.u32 %v209, 4294901760
    %v211 = vsub.f32 %v209, %v210
    %v212 = vand.u32 %v211, 4294901760
    %213 = vmatpush1.msra.mxu0 %v212
    %214 = vmatprep.subr.mxu0 0.0
    %v215 = vand.u32 %v28, 4294901760
    %v216 = vsub.f32 %v28, %v215
    %v217 = vand.u32 %v216, 4294901760
    %v218 = vsub.f32 %v216, %v217
    %v219 = vand.u32 %v218, 4294901760
    %220 = vmatpush1.msra.mxu0 %v219
    %221 = vmatprep.subr.mxu0 0.0
    %v222 = vand.u32 %v29, 4294901760
    %v223 = vsub.f32 %v29, %v222
    %v224 = vand.u32 %v223, 4294901760
    %v225 = vsub.f32 %v223, %v224
    %v226 = vand.u32 %v225, 4294901760
    %227 = vmatpush1.msra.mxu0 %v226
    %228 = vmatprep.subr.mxu0 0.0
    %v229 = vand.u32 %v30, 4294901760
    %v230 = vsub.f32 %v30, %v229
    %v231 = vand.u32 %v230, 4294901760
    %v232 = vsub.f32 %v230, %v231
    %v233 = vand.u32 %v232, 4294901760
    %234 = vmatpush1.msra.mxu0 %v233
    %235 = vmatprep.subr.mxu0 0.0
    %v236 = vand.u32 %v31, 4294901760
    %v237 = vsub.f32 %v31, %v236
    %v238 = vand.u32 %v237, 4294901760
    %v239 = vsub.f32 %v237, %v238
    %v240 = vand.u32 %v239, 4294901760
    %241 = vmatpush1.msra.mxu0 %v240
    %242 = vmatprep.subr.mxu0 0.0
    %v243 = vand.u32 %v32, 4294901760
    %v244 = vsub.f32 %v32, %v243
    %v245 = vand.u32 %v244, 4294901760
    %v246 = vsub.f32 %v244, %v245
    %v247 = vand.u32 %v246, 4294901760
    %248 = vmatpush1.msra.mxu0 %v247
    %249 = vmatprep.subr.mxu0 0.0
    %v250 = vand.u32 %v33, 4294901760
    %v251 = vsub.f32 %v33, %v250
    %v252 = vand.u32 %v251, 4294901760
    %v253 = vsub.f32 %v251, %v252
    %v254 = vand.u32 %v253, 4294901760
    %255 = vmatpush1.msra.mxu0 %v254
    %256 = vmatprep.subr.mxu0 0.0
    %v257 = vand.u32 %v34, 4294901760
    %v258 = vsub.f32 %v34, %v257
    %v259 = vand.u32 %v258, 4294901760
    %v260 = vsub.f32 %v258, %v259
    %v261 = vand.u32 %v260, 4294901760
    %262 = vmatpush1.msra.mxu0 %v261
    %263 = vmatprep.subr.mxu0 0.0
    %v264 = vand.u32 %v35, 4294901760
    %v265 = vsub.f32 %v35, %v264
    %v266 = vand.u32 %v265, 4294901760
    %v267 = vsub.f32 %v265, %v266
    %v268 = vand.u32 %v267, 4294901760
    %269 = vmatpush1.msra.mxu0 %v268
    %270 = vmatprep.subr.mxu0 0.0
    %v271 = vand.u32 %v36, 4294901760
    %v272 = vsub.f32 %v36, %v271
    %v273 = vand.u32 %v272, 4294901760
    %v274 = vsub.f32 %v272, %v273
    %v275 = vand.u32 %v274, 4294901760
    %276 = vmatpush1.msra.mxu0 %v275
    %277 = vmatprep.subr.mxu0 0.0
    %v278 = vand.u32 %v37, 4294901760
    %v279 = vsub.f32 %v37, %v278
    %v280 = vand.u32 %v279, 4294901760
    %v281 = vsub.f32 %v279, %v280
    %v282 = vand.u32 %v281, 4294901760
    %283 = vmatpush1.msra.mxu0 %v282
    %284 = vmatprep.subr.mxu0 0.0
    %v285 = vand.u32 %v38, 4294901760
    %v286 = vsub.f32 %v38, %v285
    %v287 = vand.u32 %v286, 4294901760
    %v288 = vsub.f32 %v286, %v287
    %v289 = vand.u32 %v288, 4294901760
    %290 = vmatpush1.msra.mxu0 %v289
    %291 = vmatprep.subr.mxu0 0.0
    %v292 = vand.u32 %v39, 4294901760
    %v293 = vsub.f32 %v39, %v292
    %v294 = vand.u32 %v293, 4294901760
    %v295 = vsub.f32 %v293, %v294
    %v296 = vand.u32 %v295, 4294901760
    %297 = vmatpush1.msra.mxu0 %v296
    %298 = vmatprep.subr.mxu0 0.0
    %v299 = vand.u32 %v40, 4294901760
    %v300 = vsub.f32 %v40, %v299
    %v301 = vand.u32 %v300, 4294901760
    %v302 = vsub.f32 %v300, %v301
    %v303 = vand.u32 %v302, 4294901760
    %304 = vmatpush1.msra.mxu0 %v303
    %305 = vmatprep.subr.mxu0 0.0
    %v306 = vand.u32 %v41, 4294901760
    %v307 = vsub.f32 %v41, %v306
    %v308 = vand.u32 %v307, 4294901760
    %v309 = vsub.f32 %v307, %v308
    %v310 = vand.u32 %v309, 4294901760
    %311 = vmatpush1.msra.mxu0 %v310
    %312 = vmatprep.subr.mxu0 0.0
    %v313 = vand.u32 %v42, 4294901760
    %v314 = vsub.f32 %v42, %v313
    %v315 = vand.u32 %v314, 4294901760
    %v316 = vsub.f32 %v314, %v315
    %v317 = vand.u32 %v316, 4294901760
    %318 = vmatpush1.msra.mxu0 %v317
    %319 = vmatprep.subr.mxu0 0.0
    %v320 = vand.u32 %v43, 4294901760
    %v321 = vsub.f32 %v43, %v320
    %v322 = vand.u32 %v321, 4294901760
    %v323 = vsub.f32 %v321, %v322
    %v324 = vand.u32 %v323, 4294901760
    %325 = vmatpush1.msra.mxu0 %v324
    %326 = vmatprep.subr.mxu0 0.0
    %v327 = vand.u32 %v67, 4294901760
    %v328 = vsub.f32 %v67, %v327
    %v329 = vand.u32 %v328, 4294901760
    %v330 = vsub.f32 %v328, %v329
    %v331 = vand.u32 %v330, 4294901760
    %332 = vmatpush1.msra.mxu0 %v331
    %333 = vmatprep.subr.mxu0 0.0
    %334 = vmatpush1.msra.mxu0 0.0
    %335 = vmatprep.subr.mxu0 0.0
    %336 = vmatpush1.msra.mxu0 0.0
    %337 = vmatprep.subr.mxu0 0.0
    %338 = vmatpush1.msra.mxu0 0.0
    %339 = vmatprep.subr.mxu0 0.0
    %340 = vmatpush1.msra.mxu0 0.0
    %341 = vmatprep.subr.mxu0 0.0
    %342 = vmatpush1.msra.mxu0 0.0
    %343 = vmatprep.subr.mxu0 0.0
    %344 = vmatpush1.msra.mxu0 0.0
    %345 = vmatprep.subr.mxu0 0.0
    %346 = vmatpush1.msra.mxu0 0.0
    %347 = vmatprep.subr.mxu0 0.0
    %348 = vmatpush1.msra.mxu0 0.0
    %349 = vmatprep.subr.mxu0 0.0
    %350 = vmatpush1.msra.mxu0 0.0
    %v351 = vand.u32 %v63, 4294901760
    %352 = vmatprep.mubr.f32.mxu0 %v351
    %v353 = vand.u32 %v59, 4294901760
    %354 = vmatmul.mubr.f32.gmra.mrb[0].mxu0 %v353
    %v355 = vpop.f32.mrb[0].mxu0
    %v356 = vadd.f32 %v169, %v355
    %v357 = vpop.f32.mrb[0].mxu0
    %358 = vdwg.mxu0
    %359 = vmatprep.subr.mxu0 0.0
    %v360 = vand.u32 %v22, 4294901760
    %v361 = vsub.f32 %v22, %v360
    %362 = vmatpush1.msra.mxu0 %v361
    %363 = vmatprep.subr.mxu0 0.0
    %v364 = vand.u32 %v23, 4294901760
    %v365 = vsub.f32 %v23, %v364
    %366 = vmatpush1.msra.mxu0 %v365
    %367 = vmatprep.subr.mxu0 0.0
    %v368 = vand.u32 %v24, 4294901760
    %v369 = vsub.f32 %v24, %v368
    %370 = vmatpush1.msra.mxu0 %v369
    %371 = vmatprep.subr.mxu0 0.0
    %v372 = vand.u32 %v25, 4294901760
    %v373 = vsub.f32 %v25, %v372
    %374 = vmatpush1.msra.mxu0 %v373
    %375 = vmatprep.subr.mxu0 0.0
    %v376 = vand.u32 %v26, 4294901760
    %v377 = vsub.f32 %v26, %v376
    %378 = vmatpush1.msra.mxu0 %v377
    %379 = vmatprep.subr.mxu0 0.0
    %v380 = vand.u32 %v27, 4294901760
    %v381 = vsub.f32 %v27, %v380
    %382 = vmatpush1.msra.mxu0 %v381
    %383 = vmatprep.subr.mxu0 0.0
    %v384 = vand.u32 %v28, 4294901760
    %v385 = vsub.f32 %v28, %v384
    %386 = vmatpush1.msra.mxu0 %v385
    %387 = vmatprep.subr.mxu0 0.0
    %v388 = vand.u32 %v29, 4294901760
    %v389 = vsub.f32 %v29, %v388
    %390 = vmatpush1.msra.mxu0 %v389
    %391 = vmatprep.subr.mxu0 0.0
    %v392 = vand.u32 %v30, 4294901760
    %v393 = vsub.f32 %v30, %v392
    %394 = vmatpush1.msra.mxu0 %v393
    %395 = vmatprep.subr.mxu0 0.0
    %v396 = vand.u32 %v31, 4294901760
    %v397 = vsub.f32 %v31, %v396
    %398 = vmatpush1.msra.mxu0 %v397
    %399 = vmatprep.subr.mxu0 0.0
    %v400 = vand.u32 %v32, 4294901760
    %v401 = vsub.f32 %v32, %v400
    %402 = vmatpush1.msra.mxu0 %v401
    %403 = vmatprep.subr.mxu0 0.0
    %v404 = vand.u32 %v33, 4294901760
    %v405 = vsub.f32 %v33, %v404
    %406 = vmatpush1.msra.mxu0 %v405
    %407 = vmatprep.subr.mxu0 0.0
    %v408 = vand.u32 %v34, 4294901760
    %v409 = vsub.f32 %v34, %v408
    %410 = vmatpush1.msra.mxu0 %v409
    %411 = vmatprep.subr.mxu0 0.0
    %v412 = vand.u32 %v35, 4294901760
    %v413 = vsub.f32 %v35, %v412
    %414 = vmatpush1.msra.mxu0 %v413
    %415 = vmatprep.subr.mxu0 0.0
    %v416 = vand.u32 %v36, 4294901760
    %v417 = vsub.f32 %v36, %v416
    %418 = vmatpush1.msra.mxu0 %v417
    %419 = vmatprep.subr.mxu0 0.0
    %v420 = vand.u32 %v37, 4294901760
    %v421 = vsub.f32 %v37, %v420
    %422 = vmatpush1.msra.mxu0 %v421
    %423 = vmatprep.subr.mxu0 0.0
    %v424 = vand.u32 %v38, 4294901760
    %v425 = vsub.f32 %v38, %v424
    %426 = vmatpush1.msra.mxu0 %v425
    %427 = vmatprep.subr.mxu0 0.0
    %v428 = vand.u32 %v39, 4294901760
    %v429 = vsub.f32 %v39, %v428
    %430 = vmatpush1.msra.mxu0 %v429
    %431 = vmatprep.subr.mxu0 0.0
    %v432 = vand.u32 %v40, 4294901760
    %v433 = vsub.f32 %v40, %v432
    %434 = vmatpush1.msra.mxu0 %v433
    %435 = vmatprep.subr.mxu0 0.0
    %v436 = vand.u32 %v41, 4294901760
    %v437 = vsub.f32 %v41, %v436
    %438 = vmatpush1.msra.mxu0 %v437
    %439 = vmatprep.subr.mxu0 0.0
    %v440 = vand.u32 %v42, 4294901760
    %v441 = vsub.f32 %v42, %v440
    %442 = vmatpush1.msra.mxu0 %v441
    %443 = vmatprep.subr.mxu0 0.0
    %v444 = vand.u32 %v43, 4294901760
    %v445 = vsub.f32 %v43, %v444
    %446 = vmatpush1.msra.mxu0 %v445
    %447 = vmatprep.subr.mxu0 0.0
    %v448 = vand.u32 %v67, 4294901760
    %v449 = vsub.f32 %v67, %v448
    %450 = vmatpush1.msra.mxu0 %v449
    %451 = vmatprep.subr.mxu0 0.0
    %452 = vmatpush1.msra.mxu0 0.0
    %453 = vmatprep.subr.mxu0 0.0
    %454 = vmatpush1.msra.mxu0 0.0
    %455 = vmatprep.subr.mxu0 0.0
    %456 = vmatpush1.msra.mxu0 0.0
    %457 = vmatprep.subr.mxu0 0.0
    %458 = vmatpush1.msra.mxu0 0.0
    %459 = vmatprep.subr.mxu0 0.0
    %460 = vmatpush1.msra.mxu0 0.0
    %461 = vmatprep.subr.mxu0 0.0
    %462 = vmatpush1.msra.mxu0 0.0
    %463 = vmatprep.subr.mxu0 0.0
    %464 = vmatpush1.msra.mxu0 0.0
    %465 = vmatprep.subr.mxu0 0.0
    %466 = vmatpush1.msra.mxu0 0.0
    %467 = vmatprep.subr.mxu0 0.0
    %468 = vmatpush1.msra.mxu0 0.0
    %v469 = vand.u32 %v63, 4294901760
    %v470 = vsub.f32 %v63, %v469
    %471 = vmatprep.mubr.f32.mxu0 %v470
    %v472 = vand.u32 %v59, 4294901760
    %v473 = vsub.f32 %v59, %v472
    %474 = vmatmul.mubr.f32.gmra.mrb[0].mxu0 %v473
    %v475 = vpop.f32.mrb[0].mxu0
    %v476 = vadd.f32 %v356, %v475
    %v477 = vpop.f32.mrb[0].mxu0
    %478 = vdwg.mxu0
    %479 = vmatprep.subr.mxu0 0.0
    %v480 = vand.u32 %v22, 4294901760
    %481 = vmatpush1.msra.mxu0 %v480
    %482 = vmatprep.subr.mxu0 0.0
    %v483 = vand.u32 %v23, 4294901760
    %484 = vmatpush1.msra.mxu0 %v483
    %485 = vmatprep.subr.mxu0 0.0
    %v486 = vand.u32 %v24, 4294901760
    %487 = vmatpush1.msra.mxu0 %v486
    %488 = vmatprep.subr.mxu0 0.0
    %v489 = vand.u32 %v25, 4294901760
    %490 = vmatpush1.msra.mxu0 %v489
    %491 = vmatprep.subr.mxu0 0.0
    %v492 = vand.u32 %v26, 4294901760
    %493 = vmatpush1.msra.mxu0 %v492
    %494 = vmatprep.subr.mxu0 0.0
    %v495 = vand.u32 %v27, 4294901760
    %496 = vmatpush1.msra.mxu0 %v495
    %497 = vmatprep.subr.mxu0 0.0
    %v498 = vand.u32 %v28, 4294901760
    %499 = vmatpush1.msra.mxu0 %v498
    %500 = vmatprep.subr.mxu0 0.0
    %v501 = vand.u32 %v29, 4294901760
    %502 = vmatpush1.msra.mxu0 %v501
    %503 = vmatprep.subr.mxu0 0.0
    %v504 = vand.u32 %v30, 4294901760
    %505 = vmatpush1.msra.mxu0 %v504
    %506 = vmatprep.subr.mxu0 0.0
    %v507 = vand.u32 %v31, 4294901760
    %508 = vmatpush1.msra.mxu0 %v507
    %509 = vmatprep.subr.mxu0 0.0
    %v510 = vand.u32 %v32, 4294901760
    %511 = vmatpush1.msra.mxu0 %v510
    %512 = vmatprep.subr.mxu0 0.0
    %v513 = vand.u32 %v33, 4294901760
    %514 = vmatpush1.msra.mxu0 %v513
    %515 = vmatprep.subr.mxu0 0.0
    %v516 = vand.u32 %v34, 4294901760
    %517 = vmatpush1.msra.mxu0 %v516
    %518 = vmatprep.subr.mxu0 0.0
    %v519 = vand.u32 %v35, 4294901760
    %520 = vmatpush1.msra.mxu0 %v519
    %521 = vmatprep.subr.mxu0 0.0
    %v522 = vand.u32 %v36, 4294901760
    %523 = vmatpush1.msra.mxu0 %v522
    %524 = vmatprep.subr.mxu0 0.0
    %v525 = vand.u32 %v37, 4294901760
    %526 = vmatpush1.msra.mxu0 %v525
    %527 = vmatprep.subr.mxu0 0.0
    %v528 = vand.u32 %v38, 4294901760
    %529 = vmatpush1.msra.mxu0 %v528
    %530 = vmatprep.subr.mxu0 0.0
    %v531 = vand.u32 %v39, 4294901760
    %532 = vmatpush1.msra.mxu0 %v531
    %533 = vmatprep.subr.mxu0 0.0
    %v534 = vand.u32 %v40, 4294901760
    %535 = vmatpush1.msra.mxu0 %v534
    %536 = vmatprep.subr.mxu0 0.0
    %v537 = vand.u32 %v41, 4294901760
    %538 = vmatpush1.msra.mxu0 %v537
    %539 = vmatprep.subr.mxu0 0.0
    %v540 = vand.u32 %v42, 4294901760
    %541 = vmatpush1.msra.mxu0 %v540
    %542 = vmatprep.subr.mxu0 0.0
    %v543 = vand.u32 %v43, 4294901760
    %544 = vmatpush1.msra.mxu0 %v543
    %545 = vmatprep.subr.mxu0 0.0
    %v546 = vand.u32 %v67, 4294901760
    %547 = vmatpush1.msra.mxu0 %v546
    %548 = vmatprep.subr.mxu0 0.0
    %549 = vmatpush1.msra.mxu0 0.0
    %550 = vmatprep.subr.mxu0 0.0
    %551 = vmatpush1.msra.mxu0 0.0
    %552 = vmatprep.subr.mxu0 0.0
    %553 = vmatpush1.msra.mxu0 0.0
    %554 = vmatprep.subr.mxu0 0.0
    %555 = vmatpush1.msra.mxu0 0.0
    %556 = vmatprep.subr.mxu0 0.0
    %557 = vmatpush1.msra.mxu0 0.0
    %558 = vmatprep.subr.mxu0 0.0
    %559 = vmatpush1.msra.mxu0 0.0
    %560 = vmatprep.subr.mxu0 0.0
    %561 = vmatpush1.msra.mxu0 0.0
    %562 = vmatprep.subr.mxu0 0.0
    %563 = vmatpush1.msra.mxu0 0.0
    %564 = vmatprep.subr.mxu0 0.0
    %565 = vmatpush1.msra.mxu0 0.0
    %v566 = vand.u32 %v63, 4294901760
    %v567 = vsub.f32 %v63, %v566
    %v568 = vand.u32 %v567, 4294901760
    %569 = vmatprep.mubr.f32.mxu0 %v568
    %v570 = vand.u32 %v59, 4294901760
    %v571 = vsub.f32 %v59, %v570
    %v572 = vand.u32 %v571, 4294901760
    %573 = vmatmul.mubr.f32.gmra.mrb[0].mxu0 %v572
    %v574 = vpop.f32.mrb[0].mxu0
    %v575 = vadd.f32 %v476, %v574
    %v576 = vpop.f32.mrb[0].mxu0
    %577 = vdwg.mxu0
    %578 = vmatprep.subr.mxu0 0.0
    %v579 = vand.u32 %v22, 4294901760
    %v580 = vsub.f32 %v22, %v579
    %v581 = vand.u32 %v580, 4294901760
    %582 = vmatpush1.msra.mxu0 %v581
    %583 = vmatprep.subr.mxu0 0.0
    %v584 = vand.u32 %v23, 4294901760
    %v585 = vsub.f32 %v23, %v584
    %v586 = vand.u32 %v585, 4294901760
    %587 = vmatpush1.msra.mxu0 %v586
    %588 = vmatprep.subr.mxu0 0.0
    %v589 = vand.u32 %v24, 4294901760
    %v590 = vsub.f32 %v24, %v589
    %v591 = vand.u32 %v590, 4294901760
    %592 = vmatpush1.msra.mxu0 %v591
    %593 = vmatprep.subr.mxu0 0.0
    %v594 = vand.u32 %v25, 4294901760
    %v595 = vsub.f32 %v25, %v594
    %v596 = vand.u32 %v595, 4294901760
    %597 = vmatpush1.msra.mxu0 %v596
    %598 = vmatprep.subr.mxu0 0.0
    %v599 = vand.u32 %v26, 4294901760
    %v600 = vsub.f32 %v26, %v599
    %v601 = vand.u32 %v600, 4294901760
    %602 = vmatpush1.msra.mxu0 %v601
    %603 = vmatprep.subr.mxu0 0.0
    %v604 = vand.u32 %v27, 4294901760
    %v605 = vsub.f32 %v27, %v604
    %v606 = vand.u32 %v605, 4294901760
    %607 = vmatpush1.msra.mxu0 %v606
    %608 = vmatprep.subr.mxu0 0.0
    %v609 = vand.u32 %v28, 4294901760
    %v610 = vsub.f32 %v28, %v609
    %v611 = vand.u32 %v610, 4294901760
    %612 = vmatpush1.msra.mxu0 %v611
    %613 = vmatprep.subr.mxu0 0.0
    %v614 = vand.u32 %v29, 4294901760
    %v615 = vsub.f32 %v29, %v614
    %v616 = vand.u32 %v615, 4294901760
    %617 = vmatpush1.msra.mxu0 %v616
    %618 = vmatprep.subr.mxu0 0.0
    %v619 = vand.u32 %v30, 4294901760
    %v620 = vsub.f32 %v30, %v619
    %v621 = vand.u32 %v620, 4294901760
    %622 = vmatpush1.msra.mxu0 %v621
    %623 = vmatprep.subr.mxu0 0.0
    %v624 = vand.u32 %v31, 4294901760
    %v625 = vsub.f32 %v31, %v624
    %v626 = vand.u32 %v625, 4294901760
    %627 = vmatpush1.msra.mxu0 %v626
    %628 = vmatprep.subr.mxu0 0.0
    %v629 = vand.u32 %v32, 4294901760
    %v630 = vsub.f32 %v32, %v629
    %v631 = vand.u32 %v630, 4294901760
    %632 = vmatpush1.msra.mxu0 %v631
    %633 = vmatprep.subr.mxu0 0.0
    %v634 = vand.u32 %v33, 4294901760
    %v635 = vsub.f32 %v33, %v634
    %v636 = vand.u32 %v635, 4294901760
    %637 = vmatpush1.msra.mxu0 %v636
    %638 = vmatprep.subr.mxu0 0.0
    %v639 = vand.u32 %v34, 4294901760
    %v640 = vsub.f32 %v34, %v639
    %v641 = vand.u32 %v640, 4294901760
    %642 = vmatpush1.msra.mxu0 %v641
    %643 = vmatprep.subr.mxu0 0.0
    %v644 = vand.u32 %v35, 4294901760
    %v645 = vsub.f32 %v35, %v644
    %v646 = vand.u32 %v645, 4294901760
    %647 = vmatpush1.msra.mxu0 %v646
    %648 = vmatprep.subr.mxu0 0.0
    %v649 = vand.u32 %v36, 4294901760
    %v650 = vsub.f32 %v36, %v649
    %v651 = vand.u32 %v650, 4294901760
    %652 = vmatpush1.msra.mxu0 %v651
    %653 = vmatprep.subr.mxu0 0.0
    %v654 = vand.u32 %v37, 4294901760
    %v655 = vsub.f32 %v37, %v654
    %v656 = vand.u32 %v655, 4294901760
    %657 = vmatpush1.msra.mxu0 %v656
    %658 = vmatprep.subr.mxu0 0.0
    %v659 = vand.u32 %v38, 4294901760
    %v660 = vsub.f32 %v38, %v659
    %v661 = vand.u32 %v660, 4294901760
    %662 = vmatpush1.msra.mxu0 %v661
    %663 = vmatprep.subr.mxu0 0.0
    %v664 = vand.u32 %v39, 4294901760
    %v665 = vsub.f32 %v39, %v664
    %v666 = vand.u32 %v665, 4294901760
    %667 = vmatpush1.msra.mxu0 %v666
    %668 = vmatprep.subr.mxu0 0.0
    %v669 = vand.u32 %v40, 4294901760
    %v670 = vsub.f32 %v40, %v669
    %v671 = vand.u32 %v670, 4294901760
    %672 = vmatpush1.msra.mxu0 %v671
    %673 = vmatprep.subr.mxu0 0.0
    %v674 = vand.u32 %v41, 4294901760
    %v675 = vsub.f32 %v41, %v674
    %v676 = vand.u32 %v675, 4294901760
    %677 = vmatpush1.msra.mxu0 %v676
    %678 = vmatprep.subr.mxu0 0.0
    %v679 = vand.u32 %v42, 4294901760
    %v680 = vsub.f32 %v42, %v679
    %v681 = vand.u32 %v680, 4294901760
    %682 = vmatpush1.msra.mxu0 %v681
    %683 = vmatprep.subr.mxu0 0.0
    %v684 = vand.u32 %v43, 4294901760
    %v685 = vsub.f32 %v43, %v684
    %v686 = vand.u32 %v685, 4294901760
    %687 = vmatpush1.msra.mxu0 %v686
    %688 = vmatprep.subr.mxu0 0.0
    %v689 = vand.u32 %v67, 4294901760
    %v690 = vsub.f32 %v67, %v689
    %v691 = vand.u32 %v690, 4294901760
    %692 = vmatpush1.msra.mxu0 %v691
    %693 = vmatprep.subr.mxu0 0.0
    %694 = vmatpush1.msra.mxu0 0.0
    %695 = vmatprep.subr.mxu0 0.0
    %696 = vmatpush1.msra.mxu0 0.0
    %697 = vmatprep.subr.mxu0 0.0
    %698 = vmatpush1.msra.mxu0 0.0
    %699 = vmatprep.subr.mxu0 0.0
    %700 = vmatpush1.msra.mxu0 0.0
    %701 = vmatprep.subr.mxu0 0.0
    %702 = vmatpush1.msra.mxu0 0.0
    %703 = vmatprep.subr.mxu0 0.0
    %704 = vmatpush1.msra.mxu0 0.0
    %705 = vmatprep.subr.mxu0 0.0
    %706 = vmatpush1.msra.mxu0 0.0
    %707 = vmatprep.subr.mxu0 0.0
    %708 = vmatpush1.msra.mxu0 0.0
    %709 = vmatprep.subr.mxu0 0.0
    %710 = vmatpush1.msra.mxu0 0.0
    %v711 = vand.u32 %v63, 4294901760
    %712 = vmatprep.mubr.f32.mxu0 %v711
    %v713 = vand.u32 %v59, 4294901760
    %714 = vmatmul.mubr.f32.gmra.mrb[0].mxu0 %v713
    %v715 = vpop.f32.mrb[0].mxu0
    %v716 = vadd.f32 %v575, %v715
    %v717 = vpop.f32.mrb[0].mxu0
    %718 = vdwg.mxu0
    %719 = vmatprep.subr.mxu0 0.0
    %v720 = vand.u32 %v22, 4294901760
    %721 = vmatpush1.msra.mxu0 %v720
    %722 = vmatprep.subr.mxu0 0.0
    %v723 = vand.u32 %v23, 4294901760
    %724 = vmatpush1.msra.mxu0 %v723
    %725 = vmatprep.subr.mxu0 0.0
    %v726 = vand.u32 %v24, 4294901760
    %727 = vmatpush1.msra.mxu0 %v726
    %728 = vmatprep.subr.mxu0 0.0
    %v729 = vand.u32 %v25, 4294901760
    %730 = vmatpush1.msra.mxu0 %v729
    %731 = vmatprep.subr.mxu0 0.0
    %v732 = vand.u32 %v26, 4294901760
    %733 = vmatpush1.msra.mxu0 %v732
    %734 = vmatprep.subr.mxu0 0.0
    %v735 = vand.u32 %v27, 4294901760
    %736 = vmatpush1.msra.mxu0 %v735
    %737 = vmatprep.subr.mxu0 0.0
    %v738 = vand.u32 %v28, 4294901760
    %739 = vmatpush1.msra.mxu0 %v738
    %740 = vmatprep.subr.mxu0 0.0
    %v741 = vand.u32 %v29, 4294901760
    %742 = vmatpush1.msra.mxu0 %v741
    %743 = vmatprep.subr.mxu0 0.0
    %v744 = vand.u32 %v30, 4294901760
    %745 = vmatpush1.msra.mxu0 %v744
    %746 = vmatprep.subr.mxu0 0.0
    %v747 = vand.u32 %v31, 4294901760
    %748 = vmatpush1.msra.mxu0 %v747
    %749 = vmatprep.subr.mxu0 0.0
    %v750 = vand.u32 %v32, 4294901760
    %751 = vmatpush1.msra.mxu0 %v750
    %752 = vmatprep.subr.mxu0 0.0
    %v753 = vand.u32 %v33, 4294901760
    %754 = vmatpush1.msra.mxu0 %v753
    %755 = vmatprep.subr.mxu0 0.0
    %v756 = vand.u32 %v34, 4294901760
    %757 = vmatpush1.msra.mxu0 %v756
    %758 = vmatprep.subr.mxu0 0.0
    %v759 = vand.u32 %v35, 4294901760
    %760 = vmatpush1.msra.mxu0 %v759
    %761 = vmatprep.subr.mxu0 0.0
    %v762 = vand.u32 %v36, 4294901760
    %763 = vmatpush1.msra.mxu0 %v762
    %764 = vmatprep.subr.mxu0 0.0
    %v765 = vand.u32 %v37, 4294901760
    %766 = vmatpush1.msra.mxu0 %v765
    %767 = vmatprep.subr.mxu0 0.0
    %v768 = vand.u32 %v38, 4294901760
    %769 = vmatpush1.msra.mxu0 %v768
    %770 = vmatprep.subr.mxu0 0.0
    %v771 = vand.u32 %v39, 4294901760
    %772 = vmatpush1.msra.mxu0 %v771
    %773 = vmatprep.subr.mxu0 0.0
    %v774 = vand.u32 %v40, 4294901760
    %775 = vmatpush1.msra.mxu0 %v774
    %776 = vmatprep.subr.mxu0 0.0
    %v777 = vand.u32 %v41, 4294901760
    %778 = vmatpush1.msra.mxu0 %v777
    %779 = vmatprep.subr.mxu0 0.0
    %v780 = vand.u32 %v42, 4294901760
    %781 = vmatpush1.msra.mxu0 %v780
    %782 = vmatprep.subr.mxu0 0.0
    %v783 = vand.u32 %v43, 4294901760
    %784 = vmatpush1.msra.mxu0 %v783
    %785 = vmatprep.subr.mxu0 0.0
    %v786 = vand.u32 %v67, 4294901760
    %787 = vmatpush1.msra.mxu0 %v786
    %788 = vmatprep.subr.mxu0 0.0
    %789 = vmatpush1.msra.mxu0 0.0
    %790 = vmatprep.subr.mxu0 0.0
    %791 = vmatpush1.msra.mxu0 0.0
    %792 = vmatprep.subr.mxu0 0.0
    %793 = vmatpush1.msra.mxu0 0.0
    %794 = vmatprep.subr.mxu0 0.0
    %795 = vmatpush1.msra.mxu0 0.0
    %796 = vmatprep.subr.mxu0 0.0
    %797 = vmatpush1.msra.mxu0 0.0
    %798 = vmatprep.subr.mxu0 0.0
    %799 = vmatpush1.msra.mxu0 0.0
    %800 = vmatprep.subr.mxu0 0.0
    %801 = vmatpush1.msra.mxu0 0.0
    %802 = vmatprep.subr.mxu0 0.0
    %803 = vmatpush1.msra.mxu0 0.0
    %804 = vmatprep.subr.mxu0 0.0
    %805 = vmatpush1.msra.mxu0 0.0
    %v806 = vand.u32 %v63, 4294901760
    %807 = vmatprep.mubr.f32.mxu0 %v806
    %v808 = vand.u32 %v59, 4294901760
    %809 = vmatmul.mubr.f32.gmra.mrb[0].mxu0 %v808
    %v810 = vpop.f32.mrb[0].mxu0
    %v811 = vadd.f32 %v716, %v810
    %v812 = vpop.f32.mrb[0].mxu0
    %813 = vdwg.mxu0
    %v814 = vmax.f32 %v811, 0.0
    %v815 = vld [vmem:[%s3] sm:$0xff]
    %v816 = vld [vmem:[%s3 + $0x8] sm:$0xff]
    %v817 = vld [vmem:[%s3 + $0x10] sm:$0xf]
    %v818 = vld [vmem:[%s4] sm:$0x1]
    %v820 = vlaneseq
    %v821 = vshrl.u32 %v820, 7
    %v822 = vsub.s32 0, %v821
    %v823 = vrot.slane %v818, %v822
    %vm825 = vcmask 162816
    %v827 = vsel %vm825, %v814, 0
    %v830 = vsel %vm65, %v817, 0
    %832 = vmatprep.subr.mxu0 0.0
    %v833 = vand.u32 %v815, 4294901760
    %834 = vmatpush1.msra.mxu0 %v833
    %835 = vmatprep.subr.mxu0 0.0
    %v836 = vand.u32 %v816, 4294901760
    %837 = vmatpush1.msra.mxu0 %v836
    %838 = vmatprep.subr.mxu0 0.0
    %v839 = vand.u32 %v830, 4294901760
    %840 = vmatpush1.msra.mxu0 %v839
    %841 = vmatprep.subr.mxu0 0.0
    %842 = vmatpush1.msra.mxu0 0.0
    %843 = vmatprep.subr.mxu0 0.0
    %844 = vmatpush1.msra.mxu0 0.0
    %845 = vmatprep.subr.mxu0 0.0
    %846 = vmatpush1.msra.mxu0 0.0
    %847 = vmatprep.subr.mxu0 0.0
    %848 = vmatpush1.msra.mxu0 0.0
    %849 = vmatprep.subr.mxu0 0.0
    %850 = vmatpush1.msra.mxu0 0.0
    %851 = vmatprep.subr.mxu0 0.0
    %852 = vmatpush1.msra.mxu0 0.0
    %853 = vmatprep.subr.mxu0 0.0
    %854 = vmatpush1.msra.mxu0 0.0
    %855 = vmatprep.subr.mxu0 0.0
    %856 = vmatpush1.msra.mxu0 0.0
    %857 = vmatprep.subr.mxu0 0.0
    %858 = vmatpush1.msra.mxu0 0.0
    %859 = vmatprep.subr.mxu0 0.0
    %860 = vmatpush1.msra.mxu0 0.0
    %861 = vmatprep.subr.mxu0 0.0
    %862 = vmatpush1.msra.mxu0 0.0
    %863 = vmatprep.subr.mxu0 0.0
    %864 = vmatpush1.msra.mxu0 0.0
    %865 = vmatprep.subr.mxu0 0.0
    %866 = vmatpush1.msra.mxu0 0.0
    %867 = vmatprep.subr.mxu0 0.0
    %868 = vmatpush1.msra.mxu0 0.0
    %869 = vmatprep.subr.mxu0 0.0
    %870 = vmatpush1.msra.mxu0 0.0
    %871 = vmatprep.subr.mxu0 0.0
    %872 = vmatpush1.msra.mxu0 0.0
    %873 = vmatprep.subr.mxu0 0.0
    %874 = vmatpush1.msra.mxu0 0.0
    %875 = vmatprep.subr.mxu0 0.0
    %876 = vmatpush1.msra.mxu0 0.0
    %877 = vmatprep.subr.mxu0 0.0
    %878 = vmatpush1.msra.mxu0 0.0
    %879 = vmatprep.subr.mxu0 0.0
    %880 = vmatpush1.msra.mxu0 0.0
    %881 = vmatprep.subr.mxu0 0.0
    %882 = vmatpush1.msra.mxu0 0.0
    %883 = vmatprep.subr.mxu0 0.0
    %884 = vmatpush1.msra.mxu0 0.0
    %885 = vmatprep.subr.mxu0 0.0
    %886 = vmatpush1.msra.mxu0 0.0
    %887 = vmatprep.subr.mxu0 0.0
    %888 = vmatpush1.msra.mxu0 0.0
    %889 = vmatprep.subr.mxu0 0.0
    %890 = vmatpush1.msra.mxu0 0.0
    %891 = vmatprep.subr.mxu0 0.0
    %892 = vmatpush1.msra.mxu0 0.0
    %893 = vmatprep.subr.mxu0 0.0
    %894 = vmatpush1.msra.mxu0 0.0
    %895 = vmatprep.subr.mxu0 0.0
    %896 = vmatpush1.msra.mxu0 0.0
    %897 = vmatprep.subr.mxu0 0.0
    %898 = vmatpush1.msra.mxu0 0.0
    %899 = vmatprep.mubr.f32.mxu0 0.0
    %v900 = vand.u32 %v827, 4294901760
    %v901 = vsub.f32 %v827, %v900
    %v902 = vand.u32 %v901, 4294901760
    %v903 = vsub.f32 %v901, %v902
    %v904 = vand.u32 %v903, 4294901760
    %905 = vmatmul.mubr.f32.gmra.mrb[0].mxu0 %v904
    %v906 = vpop.f32.mrb[0].mxu0
    %v907 = vadd.f32 %v823, %v906
    %v908 = vpop.f32.mrb[0].mxu0
    %909 = vdwg.mxu0
    %910 = vmatprep.subr.mxu0 0.0
    %v911 = vand.u32 %v815, 4294901760
    %v912 = vsub.f32 %v815, %v911
    %v913 = vand.u32 %v912, 4294901760
    %v914 = vsub.f32 %v912, %v913
    %v915 = vand.u32 %v914, 4294901760
    %916 = vmatpush1.msra.mxu0 %v915
    %917 = vmatprep.subr.mxu0 0.0
    %v918 = vand.u32 %v816, 4294901760
    %v919 = vsub.f32 %v816, %v918
    %v920 = vand.u32 %v919, 4294901760
    %v921 = vsub.f32 %v919, %v920
    %v922 = vand.u32 %v921, 4294901760
    %923 = vmatpush1.msra.mxu0 %v922
    %924 = vmatprep.subr.mxu0 0.0
    %v925 = vand.u32 %v830, 4294901760
    %v926 = vsub.f32 %v830, %v925
    %v927 = vand.u32 %v926, 4294901760
    %v928 = vsub.f32 %v926, %v927
    %v929 = vand.u32 %v928, 4294901760
    %930 = vmatpush1.msra.mxu0 %v929
    %931 = vmatprep.subr.mxu0 0.0
    %932 = vmatpush1.msra.mxu0 0.0
    %933 = vmatprep.subr.mxu0 0.0
    %934 = vmatpush1.msra.mxu0 0.0
    %935 = vmatprep.subr.mxu0 0.0
    %936 = vmatpush1.msra.mxu0 0.0
    %937 = vmatprep.subr.mxu0 0.0
    %938 = vmatpush1.msra.mxu0 0.0
    %939 = vmatprep.subr.mxu0 0.0
    %940 = vmatpush1.msra.mxu0 0.0
    %941 = vmatprep.subr.mxu0 0.0
    %942 = vmatpush1.msra.mxu0 0.0
    %943 = vmatprep.subr.mxu0 0.0
    %944 = vmatpush1.msra.mxu0 0.0
    %945 = vmatprep.subr.mxu0 0.0
    %946 = vmatpush1.msra.mxu0 0.0
    %947 = vmatprep.subr.mxu0 0.0
    %948 = vmatpush1.msra.mxu0 0.0
    %949 = vmatprep.subr.mxu0 0.0
    %950 = vmatpush1.msra.mxu0 0.0
    %951 = vmatprep.subr.mxu0 0.0
    %952 = vmatpush1.msra.mxu0 0.0
    %953 = vmatprep.subr.mxu0 0.0
    %954 = vmatpush1.msra.mxu0 0.0
    %955 = vmatprep.subr.mxu0 0.0
    %956 = vmatpush1.msra.mxu0 0.0
    %957 = vmatprep.subr.mxu0 0.0
    %958 = vmatpush1.msra.mxu0 0.0
    %959 = vmatprep.subr.mxu0 0.0
    %960 = vmatpush1.msra.mxu0 0.0
    %961 = vmatprep.subr.mxu0 0.0
    %962 = vmatpush1.msra.mxu0 0.0
    %963 = vmatprep.subr.mxu0 0.0
    %964 = vmatpush1.msra.mxu0 0.0
    %965 = vmatprep.subr.mxu0 0.0
    %966 = vmatpush1.msra.mxu0 0.0
    %967 = vmatprep.subr.mxu0 0.0
    %968 = vmatpush1.msra.mxu0 0.0
    %969 = vmatprep.subr.mxu0 0.0
    %970 = vmatpush1.msra.mxu0 0.0
    %971 = vmatprep.subr.mxu0 0.0
    %972 = vmatpush1.msra.mxu0 0.0
    %973 = vmatprep.subr.mxu0 0.0
    %974 = vmatpush1.msra.mxu0 0.0
    %975 = vmatprep.subr.mxu0 0.0
    %976 = vmatpush1.msra.mxu0 0.0
    %977 = vmatprep.subr.mxu0 0.0
    %978 = vmatpush1.msra.mxu0 0.0
    %979 = vmatprep.subr.mxu0 0.0
    %980 = vmatpush1.msra.mxu0 0.0
    %981 = vmatprep.subr.mxu0 0.0
    %982 = vmatpush1.msra.mxu0 0.0
    %983 = vmatprep.subr.mxu0 0.0
    %984 = vmatpush1.msra.mxu0 0.0
    %985 = vmatprep.subr.mxu0 0.0
    %986 = vmatpush1.msra.mxu0 0.0
    %987 = vmatprep.subr.mxu0 0.0
    %988 = vmatpush1.msra.mxu0 0.0
    %989 = vmatprep.mubr.f32.mxu0 0.0
    %v990 = vand.u32 %v827, 4294901760
    %991 = vmatmul.mubr.f32.gmra.mrb[0].mxu0 %v990
    %v992 = vpop.f32.mrb[0].mxu0
    %v993 = vadd.f32 %v907, %v992
    %v994 = vpop.f32.mrb[0].mxu0
    %995 = vdwg.mxu0
    %996 = vmatprep.subr.mxu0 0.0
    %v997 = vand.u32 %v815, 4294901760
    %v998 = vsub.f32 %v815, %v997
    %999 = vmatpush1.msra.mxu0 %v998
    %1000 = vmatprep.subr.mxu0 0.0
    %v1001 = vand.u32 %v816, 4294901760
    %v1002 = vsub.f32 %v816, %v1001
    %1003 = vmatpush1.msra.mxu0 %v1002
    %1004 = vmatprep.subr.mxu0 0.0
    %v1005 = vand.u32 %v830, 4294901760
    %v1006 = vsub.f32 %v830, %v1005
    %1007 = vmatpush1.msra.mxu0 %v1006
    %1008 = vmatprep.subr.mxu0 0.0
    %1009 = vmatpush1.msra.mxu0 0.0
    %1010 = vmatprep.subr.mxu0 0.0
    %1011 = vmatpush1.msra.mxu0 0.0
    %1012 = vmatprep.subr.mxu0 0.0
    %1013 = vmatpush1.msra.mxu0 0.0
    %1014 = vmatprep.subr.mxu0 0.0
    %1015 = vmatpush1.msra.mxu0 0.0
    %1016 = vmatprep.subr.mxu0 0.0
    %1017 = vmatpush1.msra.mxu0 0.0
    %1018 = vmatprep.subr.mxu0 0.0
    %1019 = vmatpush1.msra.mxu0 0.0
    %1020 = vmatprep.subr.mxu0 0.0
    %1021 = vmatpush1.msra.mxu0 0.0
    %1022 = vmatprep.subr.mxu0 0.0
    %1023 = vmatpush1.msra.mxu0 0.0
    %1024 = vmatprep.subr.mxu0 0.0
    %1025 = vmatpush1.msra.mxu0 0.0
    %1026 = vmatprep.subr.mxu0 0.0
    %1027 = vmatpush1.msra.mxu0 0.0
    %1028 = vmatprep.subr.mxu0 0.0
    %1029 = vmatpush1.msra.mxu0 0.0
    %1030 = vmatprep.subr.mxu0 0.0
    %1031 = vmatpush1.msra.mxu0 0.0
    %1032 = vmatprep.subr.mxu0 0.0
    %1033 = vmatpush1.msra.mxu0 0.0
    %1034 = vmatprep.subr.mxu0 0.0
    %1035 = vmatpush1.msra.mxu0 0.0
    %1036 = vmatprep.subr.mxu0 0.0
    %1037 = vmatpush1.msra.mxu0 0.0
    %1038 = vmatprep.subr.mxu0 0.0
    %1039 = vmatpush1.msra.mxu0 0.0
    %1040 = vmatprep.subr.mxu0 0.0
    %1041 = vmatpush1.msra.mxu0 0.0
    %1042 = vmatprep.subr.mxu0 0.0
    %1043 = vmatpush1.msra.mxu0 0.0
    %1044 = vmatprep.subr.mxu0 0.0
    %1045 = vmatpush1.msra.mxu0 0.0
    %1046 = vmatprep.subr.mxu0 0.0
    %1047 = vmatpush1.msra.mxu0 0.0
    %1048 = vmatprep.subr.mxu0 0.0
    %1049 = vmatpush1.msra.mxu0 0.0
    %1050 = vmatprep.subr.mxu0 0.0
    %1051 = vmatpush1.msra.mxu0 0.0
    %1052 = vmatprep.subr.mxu0 0.0
    %1053 = vmatpush1.msra.mxu0 0.0
    %1054 = vmatprep.subr.mxu0 0.0
    %1055 = vmatpush1.msra.mxu0 0.0
    %1056 = vmatprep.subr.mxu0 0.0
    %1057 = vmatpush1.msra.mxu0 0.0
    %1058 = vmatprep.subr.mxu0 0.0
    %1059 = vmatpush1.msra.mxu0 0.0
    %1060 = vmatprep.subr.mxu0 0.0
    %1061 = vmatpush1.msra.mxu0 0.0
    %1062 = vmatprep.subr.mxu0 0.0
    %1063 = vmatpush1.msra.mxu0 0.0
    %1064 = vmatprep.subr.mxu0 0.0
    %1065 = vmatpush1.msra.mxu0 0.0
    %1066 = vmatprep.mubr.f32.mxu0 0.0
    %v1067 = vand.u32 %v827, 4294901760
    %v1068 = vsub.f32 %v827, %v1067
    %1069 = vmatmul.mubr.f32.gmra.mrb[0].mxu0 %v1068
    %v1070 = vpop.f32.mrb[0].mxu0
    %v1071 = vadd.f32 %v993, %v1070
    %v1072 = vpop.f32.mrb[0].mxu0
    %1073 = vdwg.mxu0
    %1074 = vmatprep.subr.mxu0 0.0
    %v1075 = vand.u32 %v815, 4294901760
    %1076 = vmatpush1.msra.mxu0 %v1075
    %1077 = vmatprep.subr.mxu0 0.0
    %v1078 = vand.u32 %v816, 4294901760
    %1079 = vmatpush1.msra.mxu0 %v1078
    %1080 = vmatprep.subr.mxu0 0.0
    %v1081 = vand.u32 %v830, 4294901760
    %1082 = vmatpush1.msra.mxu0 %v1081
    %1083 = vmatprep.subr.mxu0 0.0
    %1084 = vmatpush1.msra.mxu0 0.0
    %1085 = vmatprep.subr.mxu0 0.0
    %1086 = vmatpush1.msra.mxu0 0.0
    %1087 = vmatprep.subr.mxu0 0.0
    %1088 = vmatpush1.msra.mxu0 0.0
    %1089 = vmatprep.subr.mxu0 0.0
    %1090 = vmatpush1.msra.mxu0 0.0
    %1091 = vmatprep.subr.mxu0 0.0
    %1092 = vmatpush1.msra.mxu0 0.0
    %1093 = vmatprep.subr.mxu0 0.0
    %1094 = vmatpush1.msra.mxu0 0.0
    %1095 = vmatprep.subr.mxu0 0.0
    %1096 = vmatpush1.msra.mxu0 0.0
    %1097 = vmatprep.subr.mxu0 0.0
    %1098 = vmatpush1.msra.mxu0 0.0
    %1099 = vmatprep.subr.mxu0 0.0
    %1100 = vmatpush1.msra.mxu0 0.0
    %1101 = vmatprep.subr.mxu0 0.0
    %1102 = vmatpush1.msra.mxu0 0.0
    %1103 = vmatprep.subr.mxu0 0.0
    %1104 = vmatpush1.msra.mxu0 0.0
    %1105 = vmatprep.subr.mxu0 0.0
    %1106 = vmatpush1.msra.mxu0 0.0
    %1107 = vmatprep.subr.mxu0 0.0
    %1108 = vmatpush1.msra.mxu0 0.0
    %1109 = vmatprep.subr.mxu0 0.0
    %1110 = vmatpush1.msra.mxu0 0.0
    %1111 = vmatprep.subr.mxu0 0.0
    %1112 = vmatpush1.msra.mxu0 0.0
    %1113 = vmatprep.subr.mxu0 0.0
    %1114 = vmatpush1.msra.mxu0 0.0
    %1115 = vmatprep.subr.mxu0 0.0
    %1116 = vmatpush1.msra.mxu0 0.0
    %1117 = vmatprep.subr.mxu0 0.0
    %1118 = vmatpush1.msra.mxu0 0.0
    %1119 = vmatprep.subr.mxu0 0.0
    %1120 = vmatpush1.msra.mxu0 0.0
    %1121 = vmatprep.subr.mxu0 0.0
    %1122 = vmatpush1.msra.mxu0 0.0
    %1123 = vmatprep.subr.mxu0 0.0
    %1124 = vmatpush1.msra.mxu0 0.0
    %1125 = vmatprep.subr.mxu0 0.0
    %1126 = vmatpush1.msra.mxu0 0.0
    %1127 = vmatprep.subr.mxu0 0.0
    %1128 = vmatpush1.msra.mxu0 0.0
    %1129 = vmatprep.subr.mxu0 0.0
    %1130 = vmatpush1.msra.mxu0 0.0
    %1131 = vmatprep.subr.mxu0 0.0
    %1132 = vmatpush1.msra.mxu0 0.0
    %1133 = vmatprep.subr.mxu0 0.0
    %1134 = vmatpush1.msra.mxu0 0.0
    %1135 = vmatprep.subr.mxu0 0.0
    %1136 = vmatpush1.msra.mxu0 0.0
    %1137 = vmatprep.subr.mxu0 0.0
    %1138 = vmatpush1.msra.mxu0 0.0
    %1139 = vmatprep.subr.mxu0 0.0
    %1140 = vmatpush1.msra.mxu0 0.0
    %1141 = vmatprep.mubr.f32.mxu0 0.0
    %v1142 = vand.u32 %v827, 4294901760
    %v1143 = vsub.f32 %v827, %v1142
    %v1144 = vand.u32 %v1143, 4294901760
    %1145 = vmatmul.mubr.f32.gmra.mrb[0].mxu0 %v1144
    %v1146 = vpop.f32.mrb[0].mxu0
    %v1147 = vadd.f32 %v1071, %v1146
    %v1148 = vpop.f32.mrb[0].mxu0
    %1149 = vdwg.mxu0
    %1150 = vmatprep.subr.mxu0 0.0
    %v1151 = vand.u32 %v815, 4294901760
    %v1152 = vsub.f32 %v815, %v1151
    %v1153 = vand.u32 %v1152, 4294901760
    %1154 = vmatpush1.msra.mxu0 %v1153
    %1155 = vmatprep.subr.mxu0 0.0
    %v1156 = vand.u32 %v816, 4294901760
    %v1157 = vsub.f32 %v816, %v1156
    %v1158 = vand.u32 %v1157, 4294901760
    %1159 = vmatpush1.msra.mxu0 %v1158
    %1160 = vmatprep.subr.mxu0 0.0
    %v1161 = vand.u32 %v830, 4294901760
    %v1162 = vsub.f32 %v830, %v1161
    %v1163 = vand.u32 %v1162, 4294901760
    %1164 = vmatpush1.msra.mxu0 %v1163
    %1165 = vmatprep.subr.mxu0 0.0
    %1166 = vmatpush1.msra.mxu0 0.0
    %1167 = vmatprep.subr.mxu0 0.0
    %1168 = vmatpush1.msra.mxu0 0.0
    %1169 = vmatprep.subr.mxu0 0.0
    %1170 = vmatpush1.msra.mxu0 0.0
    %1171 = vmatprep.subr.mxu0 0.0
    %1172 = vmatpush1.msra.mxu0 0.0
    %1173 = vmatprep.subr.mxu0 0.0
    %1174 = vmatpush1.msra.mxu0 0.0
    %1175 = vmatprep.subr.mxu0 0.0
    %1176 = vmatpush1.msra.mxu0 0.0
    %1177 = vmatprep.subr.mxu0 0.0
    %1178 = vmatpush1.msra.mxu0 0.0
    %1179 = vmatprep.subr.mxu0 0.0
    %1180 = vmatpush1.msra.mxu0 0.0
    %1181 = vmatprep.subr.mxu0 0.0
    %1182 = vmatpush1.msra.mxu0 0.0
    %1183 = vmatprep.subr.mxu0 0.0
    %1184 = vmatpush1.msra.mxu0 0.0
    %1185 = vmatprep.subr.mxu0 0.0
    %1186 = vmatpush1.msra.mxu0 0.0
    %1187 = vmatprep.subr.mxu0 0.0
    %1188 = vmatpush1.msra.mxu0 0.0
    %1189 = vmatprep.subr.mxu0 0.0
    %1190 = vmatpush1.msra.mxu0 0.0
    %1191 = vmatprep.subr.mxu0 0.0
    %1192 = vmatpush1.msra.mxu0 0.0
    %1193 = vmatprep.subr.mxu0 0.0
    %1194 = vmatpush1.msra.mxu0 0.0
    %1195 = vmatprep.subr.mxu0 0.0
    %1196 = vmatpush1.msra.mxu0 0.0
    %1197 = vmatprep.subr.mxu0 0.0
    %1198 = vmatpush1.msra.mxu0 0.0
    %1199 = vmatprep.subr.mxu0 0.0
    %1200 = vmatpush1.msra.mxu0 0.0
    %1201 = vmatprep.subr.mxu0 0.0
    %1202 = vmatpush1.msra.mxu0 0.0
    %1203 = vmatprep.subr.mxu0 0.0
    %1204 = vmatpush1.msra.mxu0 0.0
    %1205 = vmatprep.subr.mxu0 0.0
    %1206 = vmatpush1.msra.mxu0 0.0
    %1207 = vmatprep.subr.mxu0 0.0
    %1208 = vmatpush1.msra.mxu0 0.0
    %1209 = vmatprep.subr.mxu0 0.0
    %1210 = vmatpush1.msra.mxu0 0.0
    %1211 = vmatprep.subr.mxu0 0.0
    %1212 = vmatpush1.msra.mxu0 0.0
    %1213 = vmatprep.subr.mxu0 0.0
    %1214 = vmatpush1.msra.mxu0 0.0
    %1215 = vmatprep.subr.mxu0 0.0
    %1216 = vmatpush1.msra.mxu0 0.0
    %1217 = vmatprep.subr.mxu0 0.0
    %1218 = vmatpush1.msra.mxu0 0.0
    %1219 = vmatprep.subr.mxu0 0.0
    %1220 = vmatpush1.msra.mxu0 0.0
    %1221 = vmatprep.subr.mxu0 0.0
    %1222 = vmatpush1.msra.mxu0 0.0
    %1223 = vmatprep.mubr.f32.mxu0 0.0
    %v1224 = vand.u32 %v827, 4294901760
    %1225 = vmatmul.mubr.f32.gmra.mrb[0].mxu0 %v1224
    %v1226 = vpop.f32.mrb[0].mxu0
    %v1227 = vadd.f32 %v1147, %v1226
    %v1228 = vpop.f32.mrb[0].mxu0
    %1229 = vdwg.mxu0
    %1230 = vmatprep.subr.mxu0 0.0
    %v1231 = vand.u32 %v815, 4294901760
    %1232 = vmatpush1.msra.mxu0 %v1231
    %1233 = vmatprep.subr.mxu0 0.0
    %v1234 = vand.u32 %v816, 4294901760
    %1235 = vmatpush1.msra.mxu0 %v1234
    %1236 = vmatprep.subr.mxu0 0.0
    %v1237 = vand.u32 %v830, 4294901760
    %1238 = vmatpush1.msra.mxu0 %v1237
    %1239 = vmatprep.subr.mxu0 0.0
    %1240 = vmatpush1.msra.mxu0 0.0
    %1241 = vmatprep.subr.mxu0 0.0
    %1242 = vmatpush1.msra.mxu0 0.0
    %1243 = vmatprep.subr.mxu0 0.0
    %1244 = vmatpush1.msra.mxu0 0.0
    %1245 = vmatprep.subr.mxu0 0.0
    %1246 = vmatpush1.msra.mxu0 0.0
    %1247 = vmatprep.subr.mxu0 0.0
    %1248 = vmatpush1.msra.mxu0 0.0
    %1249 = vmatprep.subr.mxu0 0.0
    %1250 = vmatpush1.msra.mxu0 0.0
    %1251 = vmatprep.subr.mxu0 0.0
    %1252 = vmatpush1.msra.mxu0 0.0
    %1253 = vmatprep.subr.mxu0 0.0
    %1254 = vmatpush1.msra.mxu0 0.0
    %1255 = vmatprep.subr.mxu0 0.0
    %1256 = vmatpush1.msra.mxu0 0.0
    %1257 = vmatprep.subr.mxu0 0.0
    %1258 = vmatpush1.msra.mxu0 0.0
    %1259 = vmatprep.subr.mxu0 0.0
    %1260 = vmatpush1.msra.mxu0 0.0
    %1261 = vmatprep.subr.mxu0 0.0
    %1262 = vmatpush1.msra.mxu0 0.0
    %1263 = vmatprep.subr.mxu0 0.0
    %1264 = vmatpush1.msra.mxu0 0.0
    %1265 = vmatprep.subr.mxu0 0.0
    %1266 = vmatpush1.msra.mxu0 0.0
    %1267 = vmatprep.subr.mxu0 0.0
    %1268 = vmatpush1.msra.mxu0 0.0
    %1269 = vmatprep.subr.mxu0 0.0
    %1270 = vmatpush1.msra.mxu0 0.0
    %1271 = vmatprep.subr.mxu0 0.0
    %1272 = vmatpush1.msra.mxu0 0.0
    %1273 = vmatprep.subr.mxu0 0.0
    %1274 = vmatpush1.msra.mxu0 0.0
    %1275 = vmatprep.subr.mxu0 0.0
    %1276 = vmatpush1.msra.mxu0 0.0
    %1277 = vmatprep.subr.mxu0 0.0
    %1278 = vmatpush1.msra.mxu0 0.0
    %1279 = vmatprep.subr.mxu0 0.0
    %1280 = vmatpush1.msra.mxu0 0.0
    %1281 = vmatprep.subr.mxu0 0.0
    %1282 = vmatpush1.msra.mxu0 0.0
    %1283 = vmatprep.subr.mxu0 0.0
    %1284 = vmatpush1.msra.mxu0 0.0
    %1285 = vmatprep.subr.mxu0 0.0
    %1286 = vmatpush1.msra.mxu0 0.0
    %1287 = vmatprep.subr.mxu0 0.0
    %1288 = vmatpush1.msra.mxu0 0.0
    %1289 = vmatprep.subr.mxu0 0.0
    %1290 = vmatpush1.msra.mxu0 0.0
    %1291 = vmatprep.subr.mxu0 0.0
    %1292 = vmatpush1.msra.mxu0 0.0
    %1293 = vmatprep.subr.mxu0 0.0
    %1294 = vmatpush1.msra.mxu0 0.0
    %1295 = vmatprep.subr.mxu0 0.0
    %1296 = vmatpush1.msra.mxu0 0.0
    %1297 = vmatprep.mubr.f32.mxu0 0.0
    %v1298 = vand.u32 %v827, 4294901760
    %1299 = vmatmul.mubr.f32.gmra.mrb[0].mxu0 %v1298
    %v1300 = vpop.f32.mrb[0].mxu0
    %v1301 = vadd.f32 %v1227, %v1300
    %v1302 = vpop.f32.mrb[0].mxu0
    %1303 = vdwg.mxu0
    %vm1304 = vcmask 41984
    %1305 = vst.msk [vmem:[#allocation2] sm:$0x3] %vm1304, %v1301
    // Predicated region
    $region22: #{tpu_custom_call.1} parent=1 // pred_check
      _
    $region23: #{tpu_custom_call.1} parent=1 // pred_check_branch
      %1307 = sbr.rel (0) target = $region25
    $region24: #{tpu_custom_call.1} parent=1 // pred_region
      %s1309 = ssub.s32 32, 32
      %1310 = vsyncadd [#allocation3], %s1309
      %s1312 = sshll.u32 [#allocation2], 4
      %s1313 = int_to_ptr.vmem [resolvable:$true] %s1312
      %1315 = dma.vmem_to_hbm [thread:$0]  %s1313, 32, %s5, [#allocation3]
    $region25: #{tpu_custom_call.1} parent=1 // pred_fallthru
      _
    // Predicated region
    $region26: #{tpu_custom_call.1} parent=1 // pred_check
      _
    $region27: #{tpu_custom_call.1} parent=1 // pred_check_branch
      %1317 = sbr.rel (0) target = $region29
    $region28: #{tpu_custom_call.1} parent=1 // pred_region
      %1318 = dma.done [#allocation3], 32
    $region29: #{tpu_custom_call.1} parent=1 // pred_fallthru
      _
    %1319 = vsyncpa [#allocation3], 1

</llo_original>
